<compile_context>
chip_gen: v5e
topology: v5e:2x2
jax: 0.10.0
libtpu: 0.0.40
codegen_flags: <defaults>
</compile_context>

<pallas_src>
import functools

import jax
import jax.numpy as jnp
from jax import lax
from jax.experimental import pallas as pl
from jax.experimental.pallas import tpu as pltpu

_NCORES = 2            # leading "parallel" grid axis (per-core partial sums)
_CLAMP_MIN = 1e-12
_CLAMP_MAX = 1e12


def _round_up(x, m):
    return ((x + m - 1) // m) * m


def _center_loss_kernel_resident(x_ref, labels_ref, centers_ref, out_ref, acc_ref, *,
                                 batch_size, tile_rows, tiles_per_core, c_pad):
    """Resident-centers path: per-row center gather via one-hot MXU matmul.

    x_ref       : VMEM (TB, D)     — feature tile.
    labels_ref  : VMEM (TB, 1) i32 — labels for this tile (already clipped).
    centers_ref : VMEM (C_pad, D)  — all centers, resident across the grid.
    out_ref     : VMEM (1, 1, 1)   — this core's partial sum (raw, un-normalized).
    acc_ref     : VMEM (1, 1) f32  — per-core running sum of clamped distances.
    """
    core = pl.program_id(0)
    step = pl.program_id(1)

    @pl.when(step == 0)
    def _init():
        acc_ref[...] = jnp.zeros_like(acc_ref)

    x = x_ref[...].astype(jnp.float32)                                  # (TB, D)
    labels = labels_ref[...]                                            # (TB, 1)

    classes = lax.broadcasted_iota(jnp.int32, (tile_rows, c_pad), 1)    # (TB, C_pad)
    onehot = (labels == classes).astype(jnp.float32)                    # (TB, C_pad)
    c_rows = jnp.dot(onehot, centers_ref[...].astype(jnp.float32),
                     preferred_element_type=jnp.float32)                # (TB, D)

    d = x - c_rows
    d2 = jnp.sum(d * d, axis=1, keepdims=True)                          # (TB, 1)
    # PyTorch clamps AFTER masking: the on-class entry is clamp(d2, 1e-12, 1e12).
    d2 = jnp.clip(d2, _CLAMP_MIN, _CLAMP_MAX)

    base = (core * tiles_per_core + step) * tile_rows
    row_ids = base + lax.broadcasted_iota(jnp.int32, (tile_rows, 1), 0)
    valid = row_ids < batch_size                                        # pad-row mask
    acc_ref[...] += jnp.sum(jnp.where(valid, d2, 0.0), axis=0, keepdims=True)

    @pl.when(step == tiles_per_core - 1)
    def _finalize():
        out_ref[...] = acc_ref[...].reshape(1, 1, 1)


def _center_loss_kernel_gathered(x_ref, cg_ref, out_ref, acc_ref, *,
                                 batch_size, tile_rows, tiles_per_core):
    """Fallback path: centers were gathered per-row in the wrapper (XLA gather)."""
    core = pl.program_id(0)
    step = pl.program_id(1)

    @pl.when(step == 0)
    def _init():
        acc_ref[...] = jnp.zeros_like(acc_ref)

    x = x_ref[...].astype(jnp.float32)                                  # (TB, D)
    c_rows = cg_ref[...].astype(jnp.float32)                            # (TB, D)

    d = x - c_rows
    d2 = jnp.sum(d * d, axis=1, keepdims=True)                          # (TB, 1)
    d2 = jnp.clip(d2, _CLAMP_MIN, _CLAMP_MAX)

    base = (core * tiles_per_core + step) * tile_rows
    row_ids = base + lax.broadcasted_iota(jnp.int32, (tile_rows, 1), 0)
    valid = row_ids < batch_size
    acc_ref[...] += jnp.sum(jnp.where(valid, d2, 0.0), axis=0, keepdims=True)

    @pl.when(step == tiles_per_core - 1)
    def _finalize():
        out_ref[...] = acc_ref[...].reshape(1, 1, 1)


def _center_loss_pallas(x, centers, labels):
    b, d = x.shape
    c = centers.shape[0]

    # Validate labels: an out-of-range label must never index anything.
    labels_i32 = jnp.clip(labels.astype(jnp.int32), 0, c - 1)

    # --- Tile plan -----------------------------------------------------------
    per_core = -(-b // _NCORES)                       # ceil(b / NCORES)
    tb = min(512, _round_up(max(per_core, 1), 8))
    # Keep the double-buffered x tile comfortably inside every VMEM budget.
    while tb > 8 and 2 * tb * d * 4 > 24 * 1024 * 1024:
        tb = max(8, _round_up(tb // 2, 8))
    tiles_per_core = -(-per_core // tb)
    b_pad = _NCORES * tiles_per_core * tb

    # --- Residency plan (gate on v7x's 64 MiB VMEM) --------------------------
    c_pad = max(_round_up(c, 8), 8)
    resident_bytes = 2 * c_pad * d * 4                # assume double-buffered
    stream_bytes = 2 * tb * d * 4 + 2 * tb * 4
    resident = (resident_bytes + stream_bytes) <= 40 * 1024 * 1024

    # --- Pad batch-axis inputs to the tile grid ------------------------------
    pad = b_pad - b
    x_p = jnp.pad(x, ((0, pad), (0, 0)))
    labels_p = jnp.pad(labels_i32, (0, pad)).reshape(b_pad, 1)

    # --- VMEM limit from the actual plan (<= 48 MiB so it is v7x-safe) -------
    need = stream_bytes + (resident_bytes if resident else 2 * tb * d * 4)
    need += 1 * 1024 * 1024                           # out / acc / slack
    vmem_limit = int(min(max(2 * need, 16 * 1024 * 1024), 48 * 1024 * 1024))

    def batch_map(i, j):
        return (i * tiles_per_core + j, 0)

    out_shape = jax.ShapeDtypeStruct((_NCORES, 1, 1), jnp.float32)
    out_spec = pl.BlockSpec((1, 1, 1), lambda i, j: (i, 0, 0))
    scratch = [pltpu.VMEM((1, 1), jnp.float32)]
    cparams = pltpu.CompilerParams(
        # Outer axis: independent per-core partial sums -> "parallel" (megacore).
        # Inner axis: reduces into the per-core accumulator -> "arbitrary".
        dimension_semantics=("parallel", "arbitrary"),
        vmem_limit_bytes=vmem_limit,
    )

    if resident:
        centers_p = jnp.pad(centers.astype(jnp.float32), ((0, c_pad - c), (0, 0)))
        kernel = functools.partial(
            _center_loss_kernel_resident,
            batch_size=b, tile_rows=tb, tiles_per_core=tiles_per_core, c_pad=c_pad)
        out = pl.pallas_call(
            kernel,
            out_shape=out_shape,
            grid_spec=pltpu.PrefetchScalarGridSpec(
                num_scalar_prefetch=0,
                grid=(_NCORES, tiles_per_core),
                in_specs=[
                    pl.BlockSpec((tb, d), batch_map),                # x tile
                    pl.BlockSpec((tb, 1), batch_map),                # labels tile
                    pl.BlockSpec((c_pad, d), lambda i, j: (0, 0)),   # resident centers
                ],
                out_specs=out_spec,
                scratch_shapes=scratch,
            ),
            compiler_params=cparams,
        )(x_p, labels_p, centers_p)
    else:
        # Centers too large to hold resident: gather per-row in the wrapper
        # (large sequential streaming DMAs) and stream (TB, D) center tiles.
        cg = jnp.take(centers.astype(jnp.float32), labels_i32, axis=0)  # (B, D)
        cg_p = jnp.pad(cg, ((0, pad), (0, 0)))
        kernel = functools.partial(
            _center_loss_kernel_gathered,
            batch_size=b, tile_rows=tb, tiles_per_core=tiles_per_core)
        out = pl.pallas_call(
            kernel,
            out_shape=out_shape,
            grid_spec=pltpu.PrefetchScalarGridSpec(
                num_scalar_prefetch=0,
                grid=(_NCORES, tiles_per_core),
                in_specs=[
                    pl.BlockSpec((tb, d), batch_map),                # x tile
                    pl.BlockSpec((tb, d), batch_map),                # gathered centers
                ],
                out_specs=out_spec,
                scratch_shapes=scratch,
            ),
            compiler_params=cparams,
        )(x_p, cg_p)

    partials = out[:, 0, 0]
    # Each valid row also has (C-1) masked-out entries, each clamped from 0 up
    # to exactly 1e-12; add the analytic constant instead of building the
    # (B, C) mask / distmat.  Sum of constants = B*(C-1)*1e-12; after /B it is
    # (C-1)*1e-12.
    return jnp.sum(partials) / b + (c - 1) * _CLAMP_MIN


def center_loss_ref(x, centers, labels):
    """Pure-JAX reference mirroring the PyTorch forward exactly."""
    b, _ = x.shape
    c = centers.shape[0]
    distmat = (
        jnp.sum(x ** 2, axis=1, keepdims=True)
        + jnp.sum(centers ** 2, axis=1, keepdims=True).T
        - 2.0 * x @ centers.T
    )
    mask = (labels[:, None] == jnp.arange(c)[None, :]).astype(jnp.float32)
    dist = jnp.clip(distmat * mask, _CLAMP_MIN, _CLAMP_MAX)
    return jnp.sum(dist) / b


def center_loss(x, centers, labels):
    """x: (B, D) float; centers: (C, D) float; labels: (B,) int."""
    return _center_loss_pallas(x, centers, labels)


if __name__ == "__main__":
    num_classes = 2
    feat_dim = 128
    batch = 8

    key = jax.random.PRNGKey(0)
    k_x, k_c, k_l = jax.random.split(key, 3)

    # Deterministic "parameter" init (torch.randn analogue) and example inputs.
    centers = jax.random.normal(k_c, (num_classes, feat_dim), dtype=jnp.float32)
    x = jax.random.normal(k_x, (batch, feat_dim), dtype=jnp.float32)
    labels = jax.random.randint(k_l, (batch,), 0, num_classes, dtype=jnp.int32)

    loss = center_loss(x, centers, labels)
    jax.block_until_ready(loss)

    ref = center_loss_ref(x, centers, labels)
    # Kernel uses the direct ||x - c||^2 form (more accurate than the
    # expansion in the reference), so allow small f32 reformulation slack.
    assert jnp.allclose(loss, ref, rtol=1e-4, atol=1e-4), (loss, ref)

    print("KERNEL_OK")
</pallas_src>

<mosaic_0001>
module attributes {stable_mosaic.version = 11 : i64} {
  func.func @_center_loss_kernel_resident(%arg0: i32, %arg1: i32, %arg2: memref<8x128xf32, #tpu.memory_space<vmem>>, %arg3: memref<8x1xi32, #tpu.memory_space<vmem>>, %arg4: memref<8x128xf32, #tpu.memory_space<vmem>>, %arg5: memref<1x1x1xf32, #tpu.memory_space<vmem>>, %arg6: memref<1x1xf32, #tpu.memory_space<vmem>>) attributes {dimension_semantics = [#tpu.dimension_semantics<parallel>, #tpu.dimension_semantics<arbitrary>], iteration_bounds = array<i64: 2, 1>, scalar_prefetch = 0 : i64, scratch_operands = 1 : i64, tpu.core_type = #tpu.core_type<tc>, window_params = [{transform_indices = @transform_0, window_bounds = array<i64: 8, 128>}, {transform_indices = @transform_1, window_bounds = array<i64: 8, 1>}, {pipeline_mode = #tpu.pipeline_mode<synchronous>, transform_indices = @transform_2, window_bounds = array<i64: 8, 128>}, {transform_indices = @transform_3, window_bounds = array<i64: 1, 1, 1>}]} {
    %c0_i32 = arith.constant 0 : i32
    %0 = arith.cmpi eq, %arg1, %c0_i32 : i32
    %1 = arith.extui %0 : i1 to i32
    %c0_i32_0 = arith.constant 0 : i32
    %2 = arith.cmpi ne, %1, %c0_i32_0 : i32
    scf.if %2 {
      %cst_18 = arith.constant 0.000000e+00 : f32
      %38 = vector.broadcast %cst_18 : f32 to vector<1x1xf32>
      %c0_19 = arith.constant 0 : index
      %c0_20 = arith.constant 0 : index
      %39 = vector.load %arg6[%c0_19, %c0_20] : memref<1x1xf32, #tpu.memory_space<vmem>>, vector<1x1xf32>
      tpu.vector_store %arg6[%c0_19, %c0_20], %38 {strides = array<i32>} : memref<1x1xf32, #tpu.memory_space<vmem>>, vector<1x1xf32>,
    } else {
    }
    %c0 = arith.constant 0 : index
    %c0_1 = arith.constant 0 : index
    %3 = vector.load %arg2[%c0, %c0_1] : memref<8x128xf32, #tpu.memory_space<vmem>>, vector<8x128xf32>
    %c0_2 = arith.constant 0 : index
    %c0_3 = arith.constant 0 : index
    %4 = vector.load %arg3[%c0_2, %c0_3] : memref<8x1xi32, #tpu.memory_space<vmem>>, vector<8x1xi32>
    %5 = tpu.iota {dimensions = array<i32: 1>} : vector<8x8xi32>
    %6 = vector.broadcast %4 : vector<8x1xi32> to vector<8x8xi32>
    %7 = arith.cmpi eq, %6, %5 : vector<8x8xi32>
    %8 = arith.extui %7 : vector<8x8xi1> to vector<8x8xi32>
    %9 = arith.sitofp %8 : vector<8x8xi32> to vector<8x8xf32>
    %c0_4 = arith.constant 0 : index
    %c0_5 = arith.constant 0 : index
    %10 = vector.load %arg4[%c0_4, %c0_5] : memref<8x128xf32, #tpu.memory_space<vmem>>, vector<8x128xf32>
    %cst = arith.constant dense<0.000000e+00> : vector<8x128xf32>
    %11 = tpu.matmul %9, %10, %cst {dimension_numbers = #tpu.dot_dimension_numbers<[1], [0], [0], [1], [0, 0, 1, 1], [], []>} : vector<8x8xf32>, vector<8x128xf32>, vector<8x128xf32> -> vector<8x128xf32>
    %12 = arith.subf %3, %11 : vector<8x128xf32>
    %13 = arith.mulf %12, %12 : vector<8x128xf32>
    %cst_6 = arith.constant dense<0.000000e+00> : vector<8xf32>
    %14 = vector.multi_reduction <add>, %13, %cst_6 [1] : vector<8x128xf32> to vector<8xf32>
    %15 = vector.shape_cast %14 : vector<8xf32> to vector<8x1xf32>
    %cst_7 = arith.constant 9.99999996E-13 : f32
    %cst_8 = arith.constant 9.99999995E+11 : f32
    %16 = vector.broadcast %cst_7 : f32 to vector<8x1xf32>
    %17 = arith.maximumf %16, %15 : vector<8x1xf32>
    %18 = vector.broadcast %cst_8 : f32 to vector<8x1xf32>
    %19 = arith.minimumf %18, %17 : vector<8x1xf32>
    %c1_i32 = arith.constant 1 : i32
    %20 = arith.muli %arg0, %c1_i32 : i32
    %21 = arith.addi %20, %arg1 : i32
    %c8_i32 = arith.constant 8 : i32
    %22 = arith.muli %21, %c8_i32 : i32
    %23 = tpu.iota {dimensions = array<i32: 0>} : vector<8x1xi32>
    %24 = vector.broadcast %22 : i32 to vector<8x1xi32>
    %25 = arith.addi %24, %23 : vector<8x1xi32>
    %c8_i32_9 = arith.constant 8 : i32
    %26 = vector.broadcast %c8_i32_9 : i32 to vector<8x1xi32>
    %27 = arith.cmpi slt, %25, %26 : vector<8x1xi32>
    %c0_10 = arith.constant 0 : index
    %c0_11 = arith.constant 0 : index
    %28 = vector.load %arg6[%c0_10, %c0_11] : memref<1x1xf32, #tpu.memory_space<vmem>>, vector<1x1xf32>
    %cst_12 = arith.constant 0.000000e+00 : f32
    %29 = vector.broadcast %cst_12 : f32 to vector<8x1xf32>
    %30 = arith.select %27, %19, %29 : vector<8x1xi1>, vector<8x1xf32>
    %cst_13 = arith.constant dense<0.000000e+00> : vector<1xf32>
    %31 = vector.multi_reduction <add>, %30, %cst_13 [0] : vector<8x1xf32> to vector<1xf32>
    %32 = vector.shape_cast %31 : vector<1xf32> to vector<1x1xf32>
    %33 = arith.addf %28, %32 : vector<1x1xf32>
    %c0_14 = arith.constant 0 : index
    %c0_15 = arith.constant 0 : index
    %34 = vector.load %arg6[%c0_14, %c0_15] : memref<1x1xf32, #tpu.memory_space<vmem>>, vector<1x1xf32>
    tpu.vector_store %arg6[%c0_14, %c0_15], %33 {strides = array<i32>} : memref<1x1xf32, #tpu.memory_space<vmem>>, vector<1x1xf32>,
    %c0_i32_16 = arith.constant 0 : i32
    %35 = arith.cmpi eq, %arg1, %c0_i32_16 : i32
    %36 = arith.extui %35 : i1 to i32
    %c0_i32_17 = arith.constant 0 : i32
    %37 = arith.cmpi ne, %36, %c0_i32_17 : i32
    scf.if %37 {
      %c0_18 = arith.constant 0 : index
      %c0_19 = arith.constant 0 : index
      %38 = vector.load %arg6[%c0_18, %c0_19] : memref<1x1xf32, #tpu.memory_space<vmem>>, vector<1x1xf32>
      %39 = vector.shape_cast %38 : vector<1x1xf32> to vector<1x1x1xf32>
      %c0_20 = arith.constant 0 : index
      %c0_21 = arith.constant 0 : index
      %c0_22 = arith.constant 0 : index
      %40 = vector.load %arg5[%c0_20, %c0_21, %c0_22] : memref<1x1x1xf32, #tpu.memory_space<vmem>>, vector<1x1x1xf32>
      tpu.vector_store %arg5[%c0_20, %c0_21, %c0_22], %39 {strides = array<i32>} : memref<1x1x1xf32, #tpu.memory_space<vmem>>, vector<1x1x1xf32>,
    } else {
    }
    return
  }
  func.func @transform_0(%arg0: i32, %arg1: i32) -> (i32, i32) {
    %c1_i32 = arith.constant 1 : i32
    %0 = arith.muli %arg0, %c1_i32 : i32
    %1 = arith.addi %0, %arg1 : i32
    %c0_i32 = arith.constant 0 : i32
    %c0_i32_0 = arith.constant 0 : i32
    return %1, %c0_i32 : i32, i32
  }
  func.func @transform_1(%arg0: i32, %arg1: i32) -> (i32, i32) {
    %c1_i32 = arith.constant 1 : i32
    %0 = arith.muli %arg0, %c1_i32 : i32
    %1 = arith.addi %0, %arg1 : i32
    %c0_i32 = arith.constant 0 : i32
    %c0_i32_0 = arith.constant 0 : i32
    return %1, %c0_i32 : i32, i32
  }
  func.func @transform_2(%arg0: i32, %arg1: i32) -> (i32, i32) {
    %c0_i32 = arith.constant 0 : i32
    %c0_i32_0 = arith.constant 0 : i32
    %c0_i32_1 = arith.constant 0 : i32
    return %c0_i32, %c0_i32_0 : i32, i32
  }
  func.func @transform_3(%arg0: i32, %arg1: i32) -> (i32, i32, i32) {
    %c0_i32 = arith.constant 0 : i32
    %c0_i32_0 = arith.constant 0 : i32
    %c0_i32_1 = arith.constant 0 : i32
    return %arg0, %c0_i32, %c0_i32_0 : i32, i32, i32
  }
}

</mosaic_0001>

<llo_original>
// kernel: tpu_custom_call.1
$region0: #{tpu_custom_call.1}
  #allocation0 [shape = 'u32[]', space=smem, size = 0x4, offset = 0x4, fixed_abs, tag = 'smem constant byte address 0x4 - core index']
  #allocation1 [shape = 'u32[72,128]{1,0:T(1,128)}', space=vmem, size = 0x9000, scoped, tag = 'internal scratch']
  #allocation2 [shape = 'f32[1,1]{1,0:T(1,128)}', space=vmem, size = 0x200, scoped, tag = 'scratch operand']
  %s0 = inlined_call_operand.vmem [shape: f32[16,128], index: 0, kind: input, shape index: {}]
  %s1 = inlined_call_operand.vmem [shape: s32[16,1], index: 1, kind: input, shape index: {}]
  %s2 = inlined_call_operand.hbm [shape: f32[8,128], index: 2, kind: input, shape index: {}]
  %s3 = inlined_call_operand.vmem [shape: f32[2,1,1], index: 3, kind: output, shape index: {}]
  %s4 = sld [smem:[#allocation0]]
  $region57: #{tpu_custom_call.1} parent=0
    _
  %s6 = ssub.s32 1, %s4
  %s7 = scalar_select 0, %s6, %s4
  $region1: #{tpu_custom_call.1} parent=0
    #allocation3 [shape = 'u8[4096]{0}', space=vmem, size = 0x1000, scoped, tag = 'input window, operand 2, single buffered']
    #allocation4 [shape = 's32[2]{0}', space=sflag, size = 0x8, scoped, tag = 'scoped memory for tpu_custom_call.1']
    %8 = vsyncpa [#allocation4], 0
    loop: start=0, step=1, limit=4
    $region2: #{tpu_custom_call.1} parent=1 // loop_pre_header
      _
    $region3: #{tpu_custom_call.1} parent=1 // loop_header
      %s10 = sphi 0, %s14
      %p11 = scmp.ge.s32.totalorder %s10, 4
      %s17 = sphi 0, %s29
      %s18 = sphi 0, %s25
      %s19 = sphi 0, %s17
      %s20 = sphi 0, %s18
      %s21 = sphi 0, %s19
      %s22 = sphi 0, %s20
      %s34 = sphi 0, %s36
      %s37 = sphi 0, %s34
      %s38 = sphi 0, %s37
      %s54 = sphi 0, %s38
      %s62 = sphi 0, %s64
      %s65 = sphi 0, %s62
      %s66 = sphi 0, %s65
      %s82 = sphi 0, %s66
      %s86 = sphi 0, %s86
      %s88 = sphi 0, %s86
      %s89 = sphi 0, %s88
      %s103 = sphi 0, %s89
      %s109 = sphi 0, %s111
      %s112 = sphi 0, %s109
      %s113 = sphi 0, %s112
      %s129 = sphi 0, %s113
    $region4: #{tpu_custom_call.1} parent=1 // loop_header_branch
      %13 = sbr.rel (%p11) target = $region8
    $region5: #{tpu_custom_call.1} parent=1 // loop_body
      %s15 = ssub.s32 %s10, 1
      %s16 = ssub.s32 %s10, 2
      %s23 = sadd.s32 1, %s18
      %p24 = scmp.ge.s32.totalorder %s23, 1
      %s25 = scalar_select %p24, 0, %s23
      %s26 = sadd.s32 1, %s17
      %s27 = scalar_select %p24, %s26, %s17
      %p28 = scmp.ge.s32.totalorder %s27, 2
      %s29 = scalar_select %p28, 0, %s27
      %s30 = sadd.s32 %s17, %s18
      %s31 = sadd.s32 %s29, %s25
      %s32 = ssub.s32 %s30, %s31
      %p33 = scmp.eq.s32.totalorder %s32, 0
      %s35 = sadd.s32 %s34, 1
      %s36 = scalar_select %p33, %s34, %s35
      %p39 = pneg %p33
      %p40 = scmp.eq.s32.totalorder %s10, 1
      %p41 = por %p39, %p40
      %p42 = scmp.ne.s32.totalorder %s34, %s37
      %p43 = scmp.eq.s32.totalorder %s10, 0
      %p44 = por %p42, %p43
      %p45 = scmp.ne.s32.totalorder %s34, %s37
      %p46 = scmp.eq.s32.totalorder %s15, 1
      %p47 = por %p45, %p46
      %p48 = scmp.ne.s32.totalorder %s37, %s38
      %p49 = scmp.eq.s32.totalorder %s15, 0
      %p50 = por %p48, %p49
      %p51 = scmp.ne.s32.totalorder %s37, %s38
      %p52 = scmp.eq.s32.totalorder %s16, 1
      %p53 = por %p51, %p52
      %p55 = scmp.ne.s32.totalorder %s38, %s54
      %p56 = scmp.eq.s32.totalorder %s16, 0
      %p57 = por %p55, %p56
      %s58 = sadd.s32 %s17, %s18
      %s59 = sadd.s32 %s29, %s25
      %s60 = ssub.s32 %s58, %s59
      %p61 = scmp.eq.s32.totalorder %s60, 0
      %s63 = sadd.s32 %s62, 1
      %s64 = scalar_select %p61, %s62, %s63
      %p67 = pneg %p61
      %p68 = scmp.eq.s32.totalorder %s10, 1
      %p69 = por %p67, %p68
      %p70 = scmp.ne.s32.totalorder %s62, %s65
      %p71 = scmp.eq.s32.totalorder %s10, 0
      %p72 = por %p70, %p71
      %p73 = scmp.ne.s32.totalorder %s62, %s65
      %p74 = scmp.eq.s32.totalorder %s15, 1
      %p75 = por %p73, %p74
      %p76 = scmp.ne.s32.totalorder %s65, %s66
      %p77 = scmp.eq.s32.totalorder %s15, 0
      %p78 = por %p76, %p77
      %p79 = scmp.ne.s32.totalorder %s65, %s66
      %p80 = scmp.eq.s32.totalorder %s16, 1
      %p81 = por %p79, %p80
      %p83 = scmp.ne.s32.totalorder %s66, %s82
      %p84 = scmp.eq.s32.totalorder %s16, 0
      %p85 = por %p83, %p84
      %s87 = sadd.s32 %s86, 1
      %p90 = scmp.eq.s32.totalorder %s10, 1
      %p91 = scmp.ne.s32.totalorder %s86, %s88
      %p92 = scmp.eq.s32.totalorder %s10, 0
      %p93 = por %p91, %p92
      %p94 = scmp.ne.s32.totalorder %s86, %s88
      %p95 = scmp.eq.s32.totalorder %s15, 1
      %p96 = por %p94, %p95
      %p97 = scmp.ne.s32.totalorder %s88, %s89
      %p98 = scmp.eq.s32.totalorder %s15, 0
      %p99 = por %p97, %p98
      %p100 = scmp.ne.s32.totalorder %s88, %s89
      %p101 = scmp.eq.s32.totalorder %s16, 1
      %p102 = por %p100, %p101
      %p104 = scmp.ne.s32.totalorder %s89, %s103
      %p105 = scmp.eq.s32.totalorder %s16, 0
      %p106 = por %p104, %p105
      %s107 = ssub.s32 %s17, %s29
      %p108 = scmp.eq.s32.totalorder %s107, 0
      %s110 = sadd.s32 %s109, 1
      %s111 = scalar_select %p108, %s109, %s110
      %p114 = pneg %p108
      %p115 = scmp.eq.s32.totalorder %s10, 1
      %p116 = por %p114, %p115
      %p117 = scmp.ne.s32.totalorder %s109, %s112
      %p118 = scmp.eq.s32.totalorder %s10, 0
      %p119 = por %p117, %p118
      %p120 = scmp.ne.s32.totalorder %s109, %s112
      %p121 = scmp.eq.s32.totalorder %s15, 1
      %p122 = por %p120, %p121
      %p123 = scmp.ne.s32.totalorder %s112, %s113
      %p124 = scmp.eq.s32.totalorder %s15, 0
      %p125 = por %p123, %p124
      %p126 = scmp.ne.s32.totalorder %s112, %s113
      %p127 = scmp.eq.s32.totalorder %s16, 1
      %p128 = por %p126, %p127
      %p130 = scmp.ne.s32.totalorder %s113, %s129
      %p131 = scmp.eq.s32.totalorder %s16, 0
      %p132 = por %p130, %p131
      %p133 = scmp.le.s32.totalorder 1, %s10
      %p134 = scmp.lt.s32.totalorder %s10, 3
      %p135 = pnand %p133, %p134
      %p136 = pneg %p135
      // Predicated region
      $region9: #{tpu_custom_call.1} parent=5 // pred_check
        _
      $region10: #{tpu_custom_call.1} parent=5 // pred_check_branch
        %138 = sbr.rel (%p135) target = $region12
      $region11: #{tpu_custom_call.1} parent=5 // pred_region
        %s139 = ssub.s32 %s10, 1
        // Predicated region
        $region13: #{tpu_custom_call.1} parent=11 // pred_check
          %p140 = pneg %p99
        $region14: #{tpu_custom_call.1} parent=11 // pred_check_branch
          %142 = sbr.rel (%p140) target = $region16
        $region15: #{tpu_custom_call.1} parent=11 // pred_region
          %144 = vsyncadd [#allocation4], 0
          %s146 = sshll.u32 %s2, 4
          %s147 = int_to_ptr.hbm [resolvable:$true] %s146
          %s148 = sshll.u32 [#allocation3], 4
          %s149 = int_to_ptr.vmem [resolvable:$true] %s148
          %151 = dma.hbm_to_vmem [thread:$0]  %s147, 128, %s149, [#allocation4]
        $region16: #{tpu_custom_call.1} parent=11 // pred_fallthru
          _
      $region12: #{tpu_custom_call.1} parent=5 // pred_fallthru
        _
      %p152 = scmp.lt.s32.totalorder %s10, 2
      // Predicated region
      $region17: #{tpu_custom_call.1} parent=5 // pred_check
        %p153 = pneg %p152
      $region18: #{tpu_custom_call.1} parent=5 // pred_check_branch
        %155 = sbr.rel (%p153) target = $region20
      $region19: #{tpu_custom_call.1} parent=5 // pred_region
        // Predicated region
        $region21: #{tpu_custom_call.1} parent=19 // pred_check
          %p156 = pneg %p44
        $region22: #{tpu_custom_call.1} parent=19 // pred_check_branch
          %158 = sbr.rel (%p156) target = $region24
        $region23: #{tpu_custom_call.1} parent=19 // pred_region
          %s159 = sadd.s32 %s17, %s18
          %p160 = scmp.lt.s32.totalorder %s159, 1
          %s161 = scalar_select %p160, %s159, 1
          %s162 = smul.addr %s161, 8
          %s163 = scalar_lea.vmem %s0, %s162
          %s164 = sadd.s32 %s17, %s18
        $region24: #{tpu_custom_call.1} parent=19 // pred_fallthru
          _
        // Predicated region
        $region25: #{tpu_custom_call.1} parent=19 // pred_check
          %p165 = pneg %p72
        $region26: #{tpu_custom_call.1} parent=19 // pred_check_branch
          %167 = sbr.rel (%p165) target = $region28
        $region27: #{tpu_custom_call.1} parent=19 // pred_region
          %s168 = sadd.s32 %s17, %s18
          %p169 = scmp.lt.s32.totalorder %s168, 1
          %s170 = scalar_select %p169, %s168, 1
          %s171 = smul.addr %s170, 8
          %s172 = scalar_lea.vmem %s1, %s171
          %s173 = sadd.s32 %s17, %s18
        $region28: #{tpu_custom_call.1} parent=19 // pred_fallthru
          _
      $region20: #{tpu_custom_call.1} parent=5 // pred_fallthru
        _
      %p174 = scmp.le.s32.totalorder 1, %s10
      %p175 = scmp.lt.s32.totalorder %s10, 3
      %p176 = pnand %p174, %p175
      %p177 = pneg %p176
      // Predicated region
      $region29: #{tpu_custom_call.1} parent=5 // pred_check
        _
      $region30: #{tpu_custom_call.1} parent=5 // pred_check_branch
        %179 = sbr.rel (%p176) target = $region32
      $region31: #{tpu_custom_call.1} parent=5 // pred_region
        %s180 = ssub.s32 %s10, 1
        // Predicated region
        $region33: #{tpu_custom_call.1} parent=31 // pred_check
          %p181 = pneg %p99
        $region34: #{tpu_custom_call.1} parent=31 // pred_check_branch
          %183 = sbr.rel (%p181) target = $region36
        $region35: #{tpu_custom_call.1} parent=31 // pred_region
          %185 = dma.done [#allocation4], 128
        $region36: #{tpu_custom_call.1} parent=31 // pred_fallthru
          _
        %s186 = sadd.s32 %s19, %s20
        %p187 = scmp.lt.s32.totalorder %s186, 1
        %s188 = scalar_select %p187, %s186, 1
        %s189 = smul.addr %s188, 8
        %s190 = scalar_lea.vmem %s0, %s189
        %p191 = pneg %p50
        %p192 = pneg %p47
        %s193 = sadd.s32 %s19, %s20
        %p194 = scmp.lt.s32.totalorder %s193, 1
        %s195 = scalar_select %p194, %s193, 1
        %s196 = smul.addr %s195, 8
        %s197 = scalar_lea.vmem %s1, %s196
        %p198 = pneg %p78
        %p199 = pneg %p75
        %p200 = pneg %p99
        %p201 = pneg %p96
        %p202 = pneg %p125
        %p203 = pneg %p122
        %p204 = scmp.lt.s32.totalorder %s19, 1
        %s205 = scalar_select %p204, %s19, 1
        %s206 = scalar_lea.vmem %s3, %s205
        %s207 = sadd.s32 %s19, %s20
        %p208 = scmp.lt.s32.totalorder %s207, 1
        %s209 = scalar_select %p208, %s207, 1
        %s210 = smul.addr %s209, 8
        %s211 = scalar_lea.vmem %s0, %s210
        %s212 = sadd.s32 %s19, %s20
        %s213 = sadd.s32 %s19, %s20
        %p214 = scmp.lt.s32.totalorder %s213, 1
        %s215 = scalar_select %p214, %s213, 1
        %s216 = smul.addr %s215, 8
        %s217 = scalar_lea.vmem %s1, %s216
        %s218 = sadd.s32 %s19, %s20
        %p219 = scmp.lt.s32.totalorder %s19, 1
        %s220 = scalar_select %p219, %s19, 1
        %s221 = scalar_lea.vmem %s3, %s220
        %p222 = scmp.eq.s32.totalorder %s20, 0
        // Predicated region
        $region37: #{tpu_custom_call.1} parent=31 // pred_check
          %p223 = pneg %p222
        $region38: #{tpu_custom_call.1} parent=31 // pred_check_branch
          %225 = sbr.rel (%p223) target = $region40
        $region39: #{tpu_custom_call.1} parent=31 // pred_region
          %vm226 = vcmask 0
          %227 = vst.msk [vmem:[#allocation2] sm:$0x1] %vm226, 0.0
        $region40: #{tpu_custom_call.1} parent=31 // pred_fallthru
          _
        %v228 = vld [vmem:[%s211] sm:$0xff]
        %v229 = vld [vmem:[%s217] sm:$0xff]
        %v230 = vlaneseq
        %v231 = vand.u32 %v230, 127
        %232 = vset.pattern.permute.xlu0 0
        %233 = vperm.xlu0 %232, %v229
        %v234 = vpop.permute.xlu0 %233
        %vm235 = vcmp.eq.s32.totalorder %v234, %v231
        %v236 = vsel %vm235, 1, 0
        %v237 = vcvt.s32.f32 %v236
        %v238 = vld [vmem:[#allocation3] sm:$0xff]
        %vm239 = vcmask 64512
        %v241 = vsel %vm239, %v237, 0
        %243 = vmatpush.msra.mxu0 0.0
        %244 = vmatpush.msra.mxu0 0.0
        %245 = vmatpush.msra.mxu0 0.0
        %246 = vmatpush.msra.mxu0 0.0
        %247 = vmatpush.msra.mxu0 0.0
        %248 = vmatpush.msra.mxu0 0.0
        %249 = vmatpush.msra.mxu0 0.0
        %250 = vmatpush.msra.mxu0 0.0
        %251 = vmatpush.msra.mxu0 0.0
        %252 = vmatpush.msra.mxu0 0.0
        %253 = vmatpush.msra.mxu0 0.0
        %254 = vmatpush.msra.mxu0 0.0
        %255 = vmatpush.msra.mxu0 0.0
        %256 = vmatpush.msra.mxu0 0.0
        %257 = vmatpush.msra.mxu0 0.0
        %258 = vmatpush.msra.mxu0 %v238
        %259 = vmatmul.f32.gmra.mxu0 %v241
        %v260 = vpop.f32.mrf.mxu0
        %v261 = vadd.f32 0.0, %v260
        %262 = vdwg.mxu0
        %v263 = vsub.f32 %v228, %v261
        %v264 = vmul.f32 %v263, %v263
        %265 = vadd.xlane.f32.xlu0 %v264
        %v266 = vpop.xlane.xlu0 %265
        %v267 = vmax.f32 %v266, 1e-12
        %v268 = vmin.f32 %v267, 1e+12
        %s269 = sadd.s32 %s19, %s20
        %s270 = smul.u32 %s269, 8
        %v271 = vlaneseq
        %v272 = vshrl.u32 %v271, 7
        %v273 = vstv %s270
        %v274 = vadd.s32 %v273, %v272
        %vm275 = vcmp.lt.s32.totalorder %v274, 8
        %v276 = vld [vmem:[#allocation2] sm:$0x1]
        %v277 = vsel %vm275, %v268, 0.0
        %v278 = vrot.slane %v277, 4
        %v279 = vadd.f32 %v277, %v278
        %v280 = vrot.slane %v279, 2
        %v281 = vadd.f32 %v279, %v280
        %v282 = vrot.slane %v281, 1
        %v283 = vadd.f32 %v281, %v282
        %v284 = vadd.f32 %v276, %v283
        %vm285 = vcmask 0
        %286 = vst.msk [vmem:[#allocation2] sm:$0x1] %vm285, %v284
        // Predicated region
        $region41: #{tpu_custom_call.1} parent=31 // pred_check
          %p287 = pneg %p222
        $region42: #{tpu_custom_call.1} parent=31 // pred_check_branch
          %289 = sbr.rel (%p287) target = $region44
        $region43: #{tpu_custom_call.1} parent=31 // pred_region
          %v290 = vld [vmem:[#allocation2] sm:$0x1]
          %291 = vst.msk [vmem:[%s221] sm:$0x1] %vm285, %v290
        $region44: #{tpu_custom_call.1} parent=31 // pred_fallthru
          _
        %p292 = scmp.lt.s32.totalorder %s19, 1
        %s293 = scalar_select %p292, %s19, 1
        %s294 = scalar_lea.vmem %s3, %s293
        // Predicated region
        $region45: #{tpu_custom_call.1} parent=31 // pred_check
          %p295 = pneg %p122
        $region46: #{tpu_custom_call.1} parent=31 // pred_check_branch
          %297 = sbr.rel (%p295) target = $region48
        $region47: #{tpu_custom_call.1} parent=31 // pred_region
          _
        $region48: #{tpu_custom_call.1} parent=31 // pred_fallthru
          _
      $region32: #{tpu_custom_call.1} parent=5 // pred_fallthru
        _
      %p298 = scmp.le.s32.totalorder 2, %s10
      // Predicated region
      $region49: #{tpu_custom_call.1} parent=5 // pred_check
        %p299 = pneg %p298
      $region50: #{tpu_custom_call.1} parent=5 // pred_check_branch
        %301 = sbr.rel (%p299) target = $region52
      $region51: #{tpu_custom_call.1} parent=5 // pred_region
        %s302 = ssub.s32 %s10, 2
        // Predicated region
        $region53: #{tpu_custom_call.1} parent=51 // pred_check
          %p303 = pneg %p128
        $region54: #{tpu_custom_call.1} parent=51 // pred_check_branch
          %305 = sbr.rel (%p303) target = $region56
        $region55: #{tpu_custom_call.1} parent=51 // pred_region
          %p306 = scmp.lt.s32.totalorder %s21, 1
          %s307 = scalar_select %p306, %s21, 1
          %s308 = scalar_lea.vmem %s3, %s307
        $region56: #{tpu_custom_call.1} parent=51 // pred_fallthru
          _
      $region52: #{tpu_custom_call.1} parent=5 // pred_fallthru
        _
    $region6: #{tpu_custom_call.1} parent=1 // loop_footer
      %s14 = sadd.s32 1, %s10
    $region7: #{tpu_custom_call.1} parent=1 // loop_footer_branch
      %9 = sbr.rel target = $region3
    $region8: #{tpu_custom_call.1} parent=1 // loop_exit
      _
    %309 = vsyncpa [#allocation4], 1
    %s310 = scalar_lea.sflag [#allocation4], 1
    %311 = vsyncpa %s310, 1

</llo_original>
